<compile_context>
chip_gen: v5e
topology: v5e:2x2
jax: 0.10.0
libtpu: 0.0.40
codegen_flags: <defaults>
</compile_context>

<pallas_src>
import functools

import jax
import jax.numpy as jnp
from jax.experimental import pallas as pl
from jax.experimental.pallas import tpu as pltpu

LANE = 128
_VMEM_LIMIT = 48 * 1024 * 1024            # well under v7x's 64 MiB physical VMEM
_RESIDENT_H_MAX_BYTES = 16 * 1024 * 1024  # budget for 2x (double-buffered) resident H
_FUSED_MAX_BYTES = 24 * 1024 * 1024       # budget for the single fused call


def _round_up(x, m):
    return ((x + m - 1) // m) * m


def _largest_tile(n_pad, target):
    """Largest multiple of 128 that divides n_pad and is <= target (falls back to n_pad)."""
    t = (min(target, n_pad) // LANE) * LANE
    while t >= LANE:
        if n_pad % t == 0:
            return t
        t -= LANE
    return n_pad


def _pick_tiles(n_pad, target_tm, target_tk):
    tk = _largest_tile(n_pad, target_tk)
    tm = _largest_tile(n_pad, target_tm)
    # Guarantee >=2 row tiles whenever possible: the row axis is 'parallel' and v7x
    # has two TensorCores; a single row tile would leave one of them idle.
    if tm == n_pad and n_pad > LANE:
        tm = _largest_tile(n_pad, n_pad // 2)
    return tm, tk


# ----------------------------------------------------------- fused whole-net kernel
def fused_gnn_kernel(x_ref, a1_ref, a2_ref, w1_ref, b1_ref, w2_ref, b2_ref,
                     w3_ref, b3_ref, p_ref, o_ref, *, num_classes):
    """Whole network in one VMEM-resident call (small graphs).

    All matmuls run in f32 (inputs are bf16 only for the HBM->VMEM stream), so the
    only error vs. an f32 reference is the bf16 quantization of the inputs.
    """
    f32 = jnp.float32
    a1 = a1_ref[...].astype(f32)
    a2 = a2_ref[...].astype(f32)
    h = x_ref[...].astype(f32)

    # conv1 (self loops folded into A1) -> relu ; dropout(eval) = identity
    h = jnp.dot(a1, h, preferred_element_type=f32)
    h = jnp.maximum(jnp.dot(h, w1_ref[...].astype(f32), preferred_element_type=f32)
                    + b1_ref[...], 0.0)
    # conv2 (sym-normalized A2) -> relu ; dropout(eval) = identity
    h = jnp.dot(a2, h, preferred_element_type=f32)
    h = jnp.maximum(jnp.dot(h, w2_ref[...].astype(f32), preferred_element_type=f32)
                    + b2_ref[...], 0.0)
    # conv3 -> relu
    h = jnp.dot(a1, h, preferred_element_type=f32)
    h = jnp.maximum(jnp.dot(h, w3_ref[...].astype(f32), preferred_element_type=f32)
                    + b3_ref[...], 0.0)

    # global_add_pool + log_softmax (padded class lanes masked out)
    pooled = jnp.dot(p_ref[...].astype(f32), h, preferred_element_type=f32)
    col = jax.lax.broadcasted_iota(jnp.int32, pooled.shape, 1)
    logits = jnp.where(col < num_classes, pooled, -1e30)
    m = jnp.max(logits, axis=1, keepdims=True)
    z = logits - m
    lse = jnp.log(jnp.sum(jnp.exp(z), axis=1, keepdims=True))
    o_ref[...] = (z - lse).astype(o_ref.dtype)


def fused_forward(x, a1, a2, w1, b1, w2, b2, w3, b3, p, num_classes):
    g_pad = p.shape[0]
    c_pad = w3.shape[1]
    kern = functools.partial(fused_gnn_kernel, num_classes=num_classes)
    return pl.pallas_call(
        kern,
        out_shape=jax.ShapeDtypeStruct((g_pad, c_pad), jnp.float32),
        compiler_params=pltpu.CompilerParams(vmem_limit_bytes=_VMEM_LIMIT),
    )(x, a1, a2, w1, b1, w2, b2, w3, b3, p)


# ----------------------------------------------------------------- tiled GCN layer
def gcn_layer_kernel(a_ref, h_ref, w_ref, b_ref, o_ref, acc_ref, *, tk, resident_h):
    """One row tile of relu((A @ H) @ W + b); K-reduction (node tiles) over axis 1."""
    k = pl.program_id(1)

    @pl.when(k == 0)
    def _():
        acc_ref[...] = jnp.zeros_like(acc_ref)

    if resident_h:
        # Whole H lives in VMEM once; take the current K slice locally (no re-stream).
        start = pl.multiple_of(k * tk, tk)
        h_blk = h_ref[pl.ds(start, tk), :]
    else:
        h_blk = h_ref[...]
    # bf16 operands, f32 accumulation on the MXU.
    acc_ref[...] += jnp.dot(a_ref[...], h_blk, preferred_element_type=jnp.float32)

    @pl.when(k == pl.num_programs(1) - 1)
    def _():
        # Keep the f32 K-accumulation precision through the (small) transform matmul.
        z = jnp.dot(acc_ref[...], w_ref[...].astype(jnp.float32),
                    preferred_element_type=jnp.float32) + b_ref[...]
        o_ref[...] = jnp.maximum(z, 0.0).astype(o_ref.dtype)


def gcn_layer(a, h, w, b, *, tm, tk):
    n_pad = a.shape[0]
    f_in = h.shape[1]
    f_out = w.shape[1]
    grid = (n_pad // tm, n_pad // tk)

    # Resident H: fetch H once instead of re-streaming all K tiles for every row tile
    # (saves ~n_pad/tm x the H traffic on an A-stream-bound kernel).  Budget 2x for
    # Pallas' input double-buffering and stay far below v7x's 64 MiB VMEM.
    h_bytes = n_pad * f_in * h.dtype.itemsize
    resident_h = (2 * h_bytes) <= _RESIDENT_H_MAX_BYTES
    if resident_h:
        h_spec = pl.BlockSpec((n_pad, f_in), lambda i, k: (0, 0))      # resident
    else:
        h_spec = pl.BlockSpec((tk, f_in), lambda i, k: (k, 0))         # K-streamed

    kern = functools.partial(gcn_layer_kernel, tk=tk, resident_h=resident_h)
    return pl.pallas_call(
        kern,
        out_shape=jax.ShapeDtypeStruct((n_pad, f_out), jnp.bfloat16),
        grid_spec=pltpu.PrefetchScalarGridSpec(
            num_scalar_prefetch=0,
            grid=grid,
            in_specs=[
                pl.BlockSpec((tm, tk), lambda i, k: (i, k)),        # A tile (critical stream)
                h_spec,                                             # H (resident or K-tiled)
                pl.BlockSpec((f_in, f_out), lambda i, k: (0, 0)),   # W (resident)
                pl.BlockSpec((1, f_out), lambda i, k: (0, 0)),      # bias (resident)
            ],
            out_specs=pl.BlockSpec((tm, f_out), lambda i, k: (i, 0)),
            scratch_shapes=[pltpu.VMEM((tm, f_in), jnp.float32)],
        ),
        compiler_params=pltpu.CompilerParams(
            # row-tile axis is independent -> shard across cores; K is a reduction.
            dimension_semantics=("parallel", "arbitrary"),
            vmem_limit_bytes=_VMEM_LIMIT,
        ),
    )(a, h, w, b)


# ------------------------------------------------------------- pool + log_softmax
def pool_logsoftmax_kernel(p_ref, h_ref, o_ref, acc_ref, *, num_classes):
    k = pl.program_id(0)

    @pl.when(k == 0)
    def _():
        acc_ref[...] = jnp.zeros_like(acc_ref)

    # global_add_pool == P @ h   (P[g, n] = 1 iff node n belongs to graph g)
    acc_ref[...] += jnp.dot(p_ref[...], h_ref[...], preferred_element_type=jnp.float32)

    @pl.when(k == pl.num_programs(0) - 1)
    def _():
        pooled = acc_ref[...]
        col = jax.lax.broadcasted_iota(jnp.int32, pooled.shape, 1)
        logits = jnp.where(col < num_classes, pooled, -1e30)
        m = jnp.max(logits, axis=1, keepdims=True)
        z = logits - m
        lse = jnp.log(jnp.sum(jnp.exp(z), axis=1, keepdims=True))
        o_ref[...] = (z - lse).astype(o_ref.dtype)


def pool_logsoftmax(p, h, num_classes, *, tk):
    g_pad, n_pad = p.shape
    c_pad = h.shape[1]
    grid = (n_pad // tk,)
    kern = functools.partial(pool_logsoftmax_kernel, num_classes=num_classes)
    return pl.pallas_call(
        kern,
        out_shape=jax.ShapeDtypeStruct((g_pad, c_pad), jnp.float32),
        grid_spec=pltpu.PrefetchScalarGridSpec(
            num_scalar_prefetch=0,
            grid=grid,
            in_specs=[
                pl.BlockSpec((g_pad, tk), lambda k: (0, k)),
                pl.BlockSpec((tk, c_pad), lambda k: (k, 0)),
            ],
            out_specs=pl.BlockSpec((g_pad, c_pad), lambda k: (0, 0)),
            scratch_shapes=[pltpu.VMEM((g_pad, c_pad), jnp.float32)],
        ),
        compiler_params=pltpu.CompilerParams(
            dimension_semantics=("arbitrary",),
            vmem_limit_bytes=_VMEM_LIMIT,
        ),
    )(p, h)


# --------------------------------------------------------------------- full model
def _fused_vmem_bytes(n_pad, f_pad, h1_pad, h2_pad, c_pad, g_pad):
    bf16, f32 = 2, 4
    io = (2 * n_pad * n_pad * bf16                                   # A1, A2
          + n_pad * f_pad * bf16                                     # x
          + g_pad * n_pad * bf16                                     # P
          + (f_pad * h1_pad + h1_pad * h2_pad + h2_pad * c_pad) * bf16
          + (h1_pad + h2_pad + c_pad) * f32                          # biases
          + g_pad * c_pad * f32)                                     # output
    tmp = 4 * n_pad * max(f_pad, h1_pad, h2_pad, c_pad) * f32        # f32 intermediates
    return int(1.5 * (io + tmp))


def gnn_forward(x, a1, a2, w1, b1, w2, b2, w3, b3, p, num_graphs, num_classes,
                *, use_fused=None, target_tm=512, target_tk=512):
    """Padded forward of Net; returns [num_graphs, num_classes] log-probs (f32)."""
    n_pad = a1.shape[0]
    g_pad = p.shape[0]
    if use_fused is None:
        use_fused = _fused_vmem_bytes(n_pad, x.shape[1], w1.shape[1], w2.shape[1],
                                      w3.shape[1], g_pad) <= _FUSED_MAX_BYTES

    if use_fused:
        # Whole net in one VMEM-resident pallas_call: no HBM round trips of h, no
        # extra kernel launches.
        out = fused_forward(x, a1, a2, w1, b1, w2, b2, w3, b3, p, num_classes)
        return out[:num_graphs, :num_classes]

    # Tiled path (large graphs): 3 streamed GCN layers + pool/log_softmax.
    tm, tk = _pick_tiles(n_pad, target_tm, target_tk)
    h = gcn_layer(a1, x, w1, b1, tm=tm, tk=tk)   # conv1 + relu ; dropout(eval) = id
    h = gcn_layer(a2, h, w2, b2, tm=tm, tk=tk)   # conv2 + relu ; dropout(eval) = id
    h = gcn_layer(a1, h, w3, b3, tm=tm, tk=tk)   # conv3 + relu
    # The pool matmul is tiny per step -> give it its own, much larger node tile.
    out = pool_logsoftmax(p, h, num_classes, tk=_largest_tile(n_pad, 2048))
    return out[:num_graphs, :num_classes]


# ------------------------------------------------------------------------- helpers
def build_graph_tensors(edge_index, batch, num_nodes, num_graphs):
    """Plain-JAX glue: dense adjacency + GCN normalization + pooling matrix."""
    src, dst = edge_index[0], edge_index[1]
    # message flow source -> target: out[dst] += x[src]  =>  A[dst, src] += 1
    A = jnp.zeros((num_nodes, num_nodes), jnp.float32).at[dst, src].add(1.0)
    # conv1 / conv3: add_self_loops=True, normalize=False
    A1 = A + jnp.eye(num_nodes, dtype=jnp.float32)
    # conv2: add_self_loops=False, normalize=True (symmetric)
    deg = jnp.sum(A, axis=1)
    dinv = jnp.where(deg > 0, 1.0 / jnp.sqrt(deg), 0.0)
    A2 = dinv[:, None] * A * dinv[None, :]
    # pooling matrix: P[g, n] = 1 iff batch[n] == g
    P = (batch[None, :] == jnp.arange(num_graphs)[:, None]).astype(jnp.float32)
    return A1, A2, P


def _pad2(a, rows, cols, dtype):
    out = jnp.zeros((rows, cols), dtype)
    return out.at[: a.shape[0], : a.shape[1]].set(a.astype(dtype))


def reference_forward(x, A1, A2, w1, b1, w2, b2, w3, b3, P):
    h = jnp.maximum(A1 @ (x @ w1) + b1, 0.0)
    h = jnp.maximum(A2 @ (h @ w2) + b2, 0.0)
    h = jnp.maximum(A1 @ (h @ w3) + b3, 0.0)
    pooled = P @ h
    return jax.nn.log_softmax(pooled, axis=1), pooled


def _run_case(name, key, *, N, F_IN, H1, H2, C, G, E, use_fused):
    N_PAD = _round_up(N, LANE)
    F_PAD = _round_up(F_IN, LANE)
    H1_PAD = _round_up(H1, LANE)
    H2_PAD = _round_up(H2, LANE)
    C_PAD = _round_up(C, LANE)
    G_PAD = _round_up(G, 8)

    k_src, k_dst, k_x, k_w1, k_w2, k_w3 = jax.random.split(key, 6)
    src = jax.random.randint(k_src, (E,), 0, N, dtype=jnp.int32)
    dst = jax.random.randint(k_dst, (E,), 0, N, dtype=jnp.int32)
    edge_index = jnp.stack([src, dst], axis=0)                      # [2, E]
    x = jax.random.normal(k_x, (N, F_IN), jnp.float32) * 0.5        # [N, F]
    batch = (jnp.arange(N, dtype=jnp.int32) * G) // N               # contiguous graph ids

    # Deterministic GCNConv parameters (linear weight + bias), ~Glorot scale.
    w1 = jax.random.normal(k_w1, (F_IN, H1), jnp.float32) / jnp.sqrt(F_IN)
    b1 = jnp.zeros((1, H1), jnp.float32)
    w2 = jax.random.normal(k_w2, (H1, H2), jnp.float32) / jnp.sqrt(H1)
    b2 = jnp.zeros((1, H2), jnp.float32)
    w3 = jax.random.normal(k_w3, (H2, C), jnp.float32) / jnp.sqrt(H2)
    b3 = jnp.zeros((1, C), jnp.float32)

    A1, A2, P = build_graph_tensors(edge_index, batch, N, G)

    # Lane-dense (multiple-of-128) zero-padded operands; bf16 MXU inputs, f32 biases.
    xp = _pad2(x, N_PAD, F_PAD, jnp.bfloat16)
    A1p = _pad2(A1, N_PAD, N_PAD, jnp.bfloat16)
    A2p = _pad2(A2, N_PAD, N_PAD, jnp.bfloat16)
    Pp = _pad2(P, G_PAD, N_PAD, jnp.bfloat16)
    w1p = _pad2(w1, F_PAD, H1_PAD, jnp.bfloat16)
    w2p = _pad2(w2, H1_PAD, H2_PAD, jnp.bfloat16)
    w3p = _pad2(w3, H2_PAD, C_PAD, jnp.bfloat16)
    b1p = _pad2(b1, 1, H1_PAD, jnp.float32)
    b2p = _pad2(b2, 1, H2_PAD, jnp.float32)
    b3p = _pad2(b3, 1, C_PAD, jnp.float32)

    out = gnn_forward(xp, A1p, A2p, w1p, b1p, w2p, b2p, w3p, b3p, Pp, G, C,
                      use_fused=use_fused)
    out = jax.block_until_ready(out)
    assert out.shape == (G, C), (name, out.shape)

    # Rows must be valid log-probabilities.
    prob_sums = jnp.sum(jnp.exp(out), axis=1)
    assert jnp.allclose(prob_sums, 1.0, atol=1e-3), (name, prob_sums)

    ref, pooled_ref = reference_forward(x, A1, A2, w1, b1, w2, b2, w3, b3, P)
    # bf16 operands bound the achievable absolute accuracy by the pooled-logit scale.
    tol = 0.02 * float(jnp.max(jnp.abs(pooled_ref))) + 0.05
    err = float(jnp.max(jnp.abs(out - ref)))
    assert err <= tol, (name, err, tol)
    return err, tol


if __name__ == "__main__":
    key = jax.random.PRNGKey(0)
    k_small, k_large = jax.random.split(key)

    # Small graph -> fully fused single-kernel path (everything resident in VMEM).
    _run_case("fused_small", k_small, N=16, F_IN=8, H1=32, H2=32, C=8, G=2, E=40,
              use_fused=None)

    # Larger graph -> tiled multi-kernel path (forced): exercises the K reduction,
    # resident H, >=2 'parallel' row tiles and the pool/log_softmax reduction kernel.
    _run_case("tiled_large", k_large, N=600, F_IN=8, H1=32, H2=32, C=8, G=8, E=1800,
              use_fused=False)

    print("KERNEL_OK")
</pallas_src>

<mosaic_0001>
module attributes {stable_mosaic.version = 11 : i64} {
  func.func @fused_gnn_kernel(%arg0: memref<128x128xbf16, #tpu.memory_space<vmem>>, %arg1: memref<128x128xbf16, #tpu.memory_space<vmem>>, %arg2: memref<128x128xbf16, #tpu.memory_space<vmem>>, %arg3: memref<128x128xbf16, #tpu.memory_space<vmem>>, %arg4: memref<1x128xf32, #tpu.memory_space<vmem>>, %arg5: memref<128x128xbf16, #tpu.memory_space<vmem>>, %arg6: memref<1x128xf32, #tpu.memory_space<vmem>>, %arg7: memref<128x128xbf16, #tpu.memory_space<vmem>>, %arg8: memref<1x128xf32, #tpu.memory_space<vmem>>, %arg9: memref<8x128xbf16, #tpu.memory_space<vmem>>, %arg10: memref<8x128xf32, #tpu.memory_space<vmem>>) attributes {dimension_semantics = [], scalar_prefetch = 0 : i64, scratch_operands = 0 : i64, tpu.core_type = #tpu.core_type<tc>} {
    %c0 = arith.constant 0 : index
    %c0_0 = arith.constant 0 : index
    %0 = vector.load %arg1[%c0, %c0_0] : memref<128x128xbf16, #tpu.memory_space<vmem>>, vector<128x128xbf16>
    %1 = arith.extf %0 : vector<128x128xbf16> to vector<128x128xf32>
    %c0_1 = arith.constant 0 : index
    %c0_2 = arith.constant 0 : index
    %2 = vector.load %arg2[%c0_1, %c0_2] : memref<128x128xbf16, #tpu.memory_space<vmem>>, vector<128x128xbf16>
    %3 = arith.extf %2 : vector<128x128xbf16> to vector<128x128xf32>
    %c0_3 = arith.constant 0 : index
    %c0_4 = arith.constant 0 : index
    %4 = vector.load %arg0[%c0_3, %c0_4] : memref<128x128xbf16, #tpu.memory_space<vmem>>, vector<128x128xbf16>
    %5 = arith.extf %4 : vector<128x128xbf16> to vector<128x128xf32>
    %cst = arith.constant dense<0.000000e+00> : vector<128x128xf32>
    %6 = tpu.matmul %1, %5, %cst {dimension_numbers = #tpu.dot_dimension_numbers<[1], [0], [0], [1], [0, 0, 1, 1], [], []>} : vector<128x128xf32>, vector<128x128xf32>, vector<128x128xf32> -> vector<128x128xf32>
    %c0_5 = arith.constant 0 : index
    %c0_6 = arith.constant 0 : index
    %7 = vector.load %arg3[%c0_5, %c0_6] : memref<128x128xbf16, #tpu.memory_space<vmem>>, vector<128x128xbf16>
    %8 = arith.extf %7 : vector<128x128xbf16> to vector<128x128xf32>
    %cst_7 = arith.constant dense<0.000000e+00> : vector<128x128xf32>
    %9 = tpu.matmul %6, %8, %cst_7 {dimension_numbers = #tpu.dot_dimension_numbers<[1], [0], [0], [1], [0, 0, 1, 1], [], []>} : vector<128x128xf32>, vector<128x128xf32>, vector<128x128xf32> -> vector<128x128xf32>
    %c0_8 = arith.constant 0 : index
    %c0_9 = arith.constant 0 : index
    %10 = vector.load %arg4[%c0_8, %c0_9] : memref<1x128xf32, #tpu.memory_space<vmem>>, vector<1x128xf32>
    %11 = vector.broadcast %10 : vector<1x128xf32> to vector<128x128xf32>
    %12 = arith.addf %9, %11 : vector<128x128xf32>
    %cst_10 = arith.constant 0.000000e+00 : f32
    %13 = vector.broadcast %cst_10 : f32 to vector<128x128xf32>
    %14 = arith.maximumf %12, %13 : vector<128x128xf32>
    %cst_11 = arith.constant dense<0.000000e+00> : vector<128x128xf32>
    %15 = tpu.matmul %3, %14, %cst_11 {dimension_numbers = #tpu.dot_dimension_numbers<[1], [0], [0], [1], [0, 0, 1, 1], [], []>} : vector<128x128xf32>, vector<128x128xf32>, vector<128x128xf32> -> vector<128x128xf32>
    %c0_12 = arith.constant 0 : index
    %c0_13 = arith.constant 0 : index
    %16 = vector.load %arg5[%c0_12, %c0_13] : memref<128x128xbf16, #tpu.memory_space<vmem>>, vector<128x128xbf16>
    %17 = arith.extf %16 : vector<128x128xbf16> to vector<128x128xf32>
    %cst_14 = arith.constant dense<0.000000e+00> : vector<128x128xf32>
    %18 = tpu.matmul %15, %17, %cst_14 {dimension_numbers = #tpu.dot_dimension_numbers<[1], [0], [0], [1], [0, 0, 1, 1], [], []>} : vector<128x128xf32>, vector<128x128xf32>, vector<128x128xf32> -> vector<128x128xf32>
    %c0_15 = arith.constant 0 : index
    %c0_16 = arith.constant 0 : index
    %19 = vector.load %arg6[%c0_15, %c0_16] : memref<1x128xf32, #tpu.memory_space<vmem>>, vector<1x128xf32>
    %20 = vector.broadcast %19 : vector<1x128xf32> to vector<128x128xf32>
    %21 = arith.addf %18, %20 : vector<128x128xf32>
    %cst_17 = arith.constant 0.000000e+00 : f32
    %22 = vector.broadcast %cst_17 : f32 to vector<128x128xf32>
    %23 = arith.maximumf %21, %22 : vector<128x128xf32>
    %cst_18 = arith.constant dense<0.000000e+00> : vector<128x128xf32>
    %24 = tpu.matmul %1, %23, %cst_18 {dimension_numbers = #tpu.dot_dimension_numbers<[1], [0], [0], [1], [0, 0, 1, 1], [], []>} : vector<128x128xf32>, vector<128x128xf32>, vector<128x128xf32> -> vector<128x128xf32>
    %c0_19 = arith.constant 0 : index
    %c0_20 = arith.constant 0 : index
    %25 = vector.load %arg7[%c0_19, %c0_20] : memref<128x128xbf16, #tpu.memory_space<vmem>>, vector<128x128xbf16>
    %26 = arith.extf %25 : vector<128x128xbf16> to vector<128x128xf32>
    %cst_21 = arith.constant dense<0.000000e+00> : vector<128x128xf32>
    %27 = tpu.matmul %24, %26, %cst_21 {dimension_numbers = #tpu.dot_dimension_numbers<[1], [0], [0], [1], [0, 0, 1, 1], [], []>} : vector<128x128xf32>, vector<128x128xf32>, vector<128x128xf32> -> vector<128x128xf32>
    %c0_22 = arith.constant 0 : index
    %c0_23 = arith.constant 0 : index
    %28 = vector.load %arg8[%c0_22, %c0_23] : memref<1x128xf32, #tpu.memory_space<vmem>>, vector<1x128xf32>
    %29 = vector.broadcast %28 : vector<1x128xf32> to vector<128x128xf32>
    %30 = arith.addf %27, %29 : vector<128x128xf32>
    %cst_24 = arith.constant 0.000000e+00 : f32
    %31 = vector.broadcast %cst_24 : f32 to vector<128x128xf32>
    %32 = arith.maximumf %30, %31 : vector<128x128xf32>
    %c0_25 = arith.constant 0 : index
    %c0_26 = arith.constant 0 : index
    %33 = vector.load %arg9[%c0_25, %c0_26] : memref<8x128xbf16, #tpu.memory_space<vmem>>, vector<8x128xbf16>
    %34 = arith.extf %33 : vector<8x128xbf16> to vector<8x128xf32>
    %cst_27 = arith.constant dense<0.000000e+00> : vector<8x128xf32>
    %35 = tpu.matmul %34, %32, %cst_27 {dimension_numbers = #tpu.dot_dimension_numbers<[1], [0], [0], [1], [0, 0, 1, 1], [], []>} : vector<8x128xf32>, vector<128x128xf32>, vector<8x128xf32> -> vector<8x128xf32>
    %36 = tpu.iota {dimensions = array<i32: 1>} : vector<8x128xi32>
    %c8_i32 = arith.constant 8 : i32
    %37 = vector.broadcast %c8_i32 : i32 to vector<8x128xi32>
    %38 = arith.cmpi slt, %36, %37 : vector<8x128xi32>
    %cst_28 = arith.constant -1.000000e+30 : f32
    %39 = vector.broadcast %cst_28 : f32 to vector<8x128xf32>
    %40 = arith.select %38, %35, %39 : vector<8x128xi1>, vector<8x128xf32>
    %cst_29 = arith.constant dense<0xFF800000> : vector<8xf32>
    %41 = vector.multi_reduction <maximumf>, %40, %cst_29 [1] : vector<8x128xf32> to vector<8xf32>
    %42 = vector.shape_cast %41 : vector<8xf32> to vector<8x1xf32>
    %43 = vector.broadcast %42 : vector<8x1xf32> to vector<8x128xf32>
    %44 = arith.subf %40, %43 : vector<8x128xf32>
    %45 = math.exp %44 : vector<8x128xf32>
    %cst_30 = arith.constant dense<0.000000e+00> : vector<8xf32>
    %46 = vector.multi_reduction <add>, %45, %cst_30 [1] : vector<8x128xf32> to vector<8xf32>
    %47 = vector.shape_cast %46 : vector<8xf32> to vector<8x1xf32>
    %48 = math.log %47 : vector<8x1xf32>
    %49 = vector.broadcast %48 : vector<8x1xf32> to vector<8x128xf32>
    %50 = arith.subf %44, %49 : vector<8x128xf32>
    %c0_31 = arith.constant 0 : index
    %c0_32 = arith.constant 0 : index
    %51 = vector.load %arg10[%c0_31, %c0_32] : memref<8x128xf32, #tpu.memory_space<vmem>>, vector<8x128xf32>
    tpu.vector_store %arg10[%c0_31, %c0_32], %50 {strides = array<i32>} : memref<8x128xf32, #tpu.memory_space<vmem>>, vector<8x128xf32>,
    return
  }
}

</mosaic_0001>

<llo_original>
// kernel: tpu_custom_call.1
$region0: #{tpu_custom_call.1}
  #allocation0 [shape = 'u32[]', space=smem, size = 0x4, offset = 0x4, fixed_abs, tag = 'smem constant byte address 0x4 - core index']
  #allocation1 [shape = 'u32[72,128]{1,0:T(1,128)}', space=vmem, size = 0x9000, scoped, tag = 'internal scratch']
  %s0 = inlined_call_operand.hbm [shape: bf16[128,128], index: 0, kind: input, shape index: {}]
  %s1 = inlined_call_operand.hbm [shape: bf16[128,128], index: 1, kind: input, shape index: {}]
  %s2 = inlined_call_operand.hbm [shape: bf16[128,128], index: 2, kind: input, shape index: {}]
  %s3 = inlined_call_operand.hbm [shape: bf16[128,128], index: 3, kind: input, shape index: {}]
  %s4 = inlined_call_operand.vmem [shape: f32[1,128], index: 4, kind: input, shape index: {}]
  %s5 = inlined_call_operand.hbm [shape: bf16[128,128], index: 5, kind: input, shape index: {}]
  %s6 = inlined_call_operand.vmem [shape: f32[1,128], index: 6, kind: input, shape index: {}]
  %s7 = inlined_call_operand.hbm [shape: bf16[128,128], index: 7, kind: input, shape index: {}]
  %s8 = inlined_call_operand.vmem [shape: f32[1,128], index: 8, kind: input, shape index: {}]
  %s9 = inlined_call_operand.vmem [shape: bf16[8,128], index: 9, kind: input, shape index: {}]
  %s10 = inlined_call_operand.hbm [shape: f32[8,128], index: 10, kind: output, shape index: {}]
  %s11 = sld [smem:[#allocation0]]
  $region74: #{tpu_custom_call.1} parent=0
    _
  %s13 = ssub.s32 1, %s11
  %s14 = scalar_select 0, %s13, %s11
  $region1: #{tpu_custom_call.1} parent=0
    #allocation2 [shape = 'u8[32768]{0}', space=vmem, size = 0x8000, scoped, tag = 'input window, operand 0, single buffered']
    #allocation3 [shape = 's32[1]{0}', space=sflag, size = 0x4, scoped, tag = 'scoped memory for tpu_custom_call.1']
    #allocation4 [shape = 's32[1]{0}', space=sflag, size = 0x4, scoped, tag = 'scoped memory for tpu_custom_call.1']
    #allocation5 [shape = 'u8[32768]{0}', space=vmem, size = 0x8000, scoped, tag = 'input window, operand 1, single buffered']
    #allocation6 [shape = 's32[1]{0}', space=sflag, size = 0x4, scoped, tag = 'scoped memory for tpu_custom_call.1']
    #allocation7 [shape = 'u8[32768]{0}', space=vmem, size = 0x8000, scoped, tag = 'input window, operand 2, single buffered']
    #allocation8 [shape = 'u8[32768]{0}', space=vmem, size = 0x8000, scoped, tag = 'input window, operand 3, single buffered']
    #allocation9 [shape = 's32[1]{0}', space=sflag, size = 0x4, scoped, tag = 'scoped memory for tpu_custom_call.1']
    #allocation10 [shape = 'u8[32768]{0}', space=vmem, size = 0x8000, scoped, tag = 'input window, operand 5, single buffered']
    #allocation11 [shape = 'u8[32768]{0}', space=vmem, size = 0x8000, scoped, tag = 'input window, operand 7, single buffered']
    #allocation12 [shape = 's32[1]{0}', space=sflag, size = 0x4, scoped, tag = 'scoped memory for tpu_custom_call.1']
    #allocation13 [shape = 'u8[4096]{0}', space=vmem, size = 0x1000, scoped, tag = 'output window, operand 0, single buffered']
    %15 = vsyncpa [#allocation3], 0
    %16 = vsyncpa [#allocation6], 0
    %17 = vsyncpa [#allocation9], 0
    %18 = vsyncpa [#allocation12], 0
    %19 = vsyncpa [#allocation4], 0
    // Predicated region
    $region2: #{tpu_custom_call.1} parent=1 // pred_check
      _
    $region3: #{tpu_custom_call.1} parent=1 // pred_check_branch
      %21 = sbr.rel (0) target = $region5
    $region4: #{tpu_custom_call.1} parent=1 // pred_region
      %23 = vsyncadd [#allocation3], 0
      %s24 = sshll.u32 %s0, 4
      %s25 = int_to_ptr.hbm [resolvable:$true] %s24
      %s26 = sshll.u32 [#allocation2], 4
      %s27 = int_to_ptr.vmem [resolvable:$true] %s26
      %32 = dma.hbm_to_vmem [thread:$0]  %s25, 1024, %s27, [#allocation3], 64, 64, 4
    $region5: #{tpu_custom_call.1} parent=1 // pred_fallthru
      _
    // Predicated region
    $region6: #{tpu_custom_call.1} parent=1 // pred_check
      _
    $region7: #{tpu_custom_call.1} parent=1 // pred_check_branch
      %34 = sbr.rel (0) target = $region9
    $region8: #{tpu_custom_call.1} parent=1 // pred_region
      %36 = vsyncadd [#allocation6], 0
      %s37 = sshll.u32 %s1, 4
      %s38 = int_to_ptr.hbm [resolvable:$true] %s37
      %s39 = sshll.u32 [#allocation5], 4
      %s40 = int_to_ptr.vmem [resolvable:$true] %s39
      %45 = dma.hbm_to_vmem [thread:$0]  %s38, 1024, %s40, [#allocation6], 64, 64, 4
    $region9: #{tpu_custom_call.1} parent=1 // pred_fallthru
      _
    // Predicated region
    $region10: #{tpu_custom_call.1} parent=1 // pred_check
      _
    $region11: #{tpu_custom_call.1} parent=1 // pred_check_branch
      %47 = sbr.rel (0) target = $region13
    $region12: #{tpu_custom_call.1} parent=1 // pred_region
      %49 = vsyncadd [#allocation6], 0
      %s50 = sshll.u32 %s2, 4
      %s51 = int_to_ptr.hbm [resolvable:$true] %s50
      %s52 = sshll.u32 [#allocation7], 4
      %s53 = int_to_ptr.vmem [resolvable:$true] %s52
      %58 = dma.hbm_to_vmem [thread:$0]  %s51, 1024, %s53, [#allocation6], 64, 64, 4
    $region13: #{tpu_custom_call.1} parent=1 // pred_fallthru
      _
    // Predicated region
    $region14: #{tpu_custom_call.1} parent=1 // pred_check
      _
    $region15: #{tpu_custom_call.1} parent=1 // pred_check_branch
      %60 = sbr.rel (0) target = $region17
    $region16: #{tpu_custom_call.1} parent=1 // pred_region
      %62 = vsyncadd [#allocation9], 0
      %s63 = sshll.u32 %s3, 4
      %s64 = int_to_ptr.hbm [resolvable:$true] %s63
      %s65 = sshll.u32 [#allocation8], 4
      %s66 = int_to_ptr.vmem [resolvable:$true] %s65
      %71 = dma.hbm_to_vmem [thread:$0]  %s64, 1024, %s66, [#allocation9], 64, 64, 4
    $region17: #{tpu_custom_call.1} parent=1 // pred_fallthru
      _
    // Predicated region
    $region18: #{tpu_custom_call.1} parent=1 // pred_check
      _
    $region19: #{tpu_custom_call.1} parent=1 // pred_check_branch
      %73 = sbr.rel (0) target = $region21
    $region20: #{tpu_custom_call.1} parent=1 // pred_region
      _
    $region21: #{tpu_custom_call.1} parent=1 // pred_fallthru
      _
    // Predicated region
    $region22: #{tpu_custom_call.1} parent=1 // pred_check
      _
    $region23: #{tpu_custom_call.1} parent=1 // pred_check_branch
      %75 = sbr.rel (0) target = $region25
    $region24: #{tpu_custom_call.1} parent=1 // pred_region
      %77 = vsyncadd [#allocation9], 0
      %s78 = sshll.u32 %s5, 4
      %s79 = int_to_ptr.hbm [resolvable:$true] %s78
      %s80 = sshll.u32 [#allocation10], 4
      %s81 = int_to_ptr.vmem [resolvable:$true] %s80
      %86 = dma.hbm_to_vmem [thread:$0]  %s79, 1024, %s81, [#allocation9], 64, 64, 4
    $region25: #{tpu_custom_call.1} parent=1 // pred_fallthru
      _
    // Predicated region
    $region26: #{tpu_custom_call.1} parent=1 // pred_check
      _
    $region27: #{tpu_custom_call.1} parent=1 // pred_check_branch
      %88 = sbr.rel (0) target = $region29
    $region28: #{tpu_custom_call.1} parent=1 // pred_region
      _
    $region29: #{tpu_custom_call.1} parent=1 // pred_fallthru
      _
    // Predicated region
    $region30: #{tpu_custom_call.1} parent=1 // pred_check
      _
    $region31: #{tpu_custom_call.1} parent=1 // pred_check_branch
      %90 = sbr.rel (0) target = $region33
    $region32: #{tpu_custom_call.1} parent=1 // pred_region
      %92 = vsyncadd [#allocation12], 0
      %s93 = sshll.u32 %s7, 4
      %s94 = int_to_ptr.hbm [resolvable:$true] %s93
      %s95 = sshll.u32 [#allocation11], 4
      %s96 = int_to_ptr.vmem [resolvable:$true] %s95
      %101 = dma.hbm_to_vmem [thread:$0]  %s94, 1024, %s96, [#allocation12], 64, 64, 4
    $region33: #{tpu_custom_call.1} parent=1 // pred_fallthru
      _
    // Predicated region
    $region34: #{tpu_custom_call.1} parent=1 // pred_check
      _
    $region35: #{tpu_custom_call.1} parent=1 // pred_check_branch
      %103 = sbr.rel (0) target = $region37
    $region36: #{tpu_custom_call.1} parent=1 // pred_region
      _
    $region37: #{tpu_custom_call.1} parent=1 // pred_fallthru
      _
    // Predicated region
    $region38: #{tpu_custom_call.1} parent=1 // pred_check
      _
    $region39: #{tpu_custom_call.1} parent=1 // pred_check_branch
      %105 = sbr.rel (0) target = $region41
    $region40: #{tpu_custom_call.1} parent=1 // pred_region
      _
    $region41: #{tpu_custom_call.1} parent=1 // pred_fallthru
      _
    // Predicated region
    $region42: #{tpu_custom_call.1} parent=1 // pred_check
      _
    $region43: #{tpu_custom_call.1} parent=1 // pred_check_branch
      %107 = sbr.rel (0) target = $region45
    $region44: #{tpu_custom_call.1} parent=1 // pred_region
      %109 = dma.done [#allocation3], 1024
    $region45: #{tpu_custom_call.1} parent=1 // pred_fallthru
      _
    // Predicated region
    $region46: #{tpu_custom_call.1} parent=1 // pred_check
      _
    $region47: #{tpu_custom_call.1} parent=1 // pred_check_branch
      %111 = sbr.rel (0) target = $region49
    $region48: #{tpu_custom_call.1} parent=1 // pred_region
      %113 = dma.done [#allocation6], 1024
    $region49: #{tpu_custom_call.1} parent=1 // pred_fallthru
      _
    // Predicated region
    $region50: #{tpu_custom_call.1} parent=1 // pred_check
      _
    $region51: #{tpu_custom_call.1} parent=1 // pred_check_branch
      %115 = sbr.rel (0) target = $region53
    $region52: #{tpu_custom_call.1} parent=1 // pred_region
      %117 = dma.done [#allocation6], 1024
    $region53: #{tpu_custom_call.1} parent=1 // pred_fallthru
      _
    // Predicated region
    $region54: #{tpu_custom_call.1} parent=1 // pred_check
      _
    $region55: #{tpu_custom_call.1} parent=1 // pred_check_branch
      %119 = sbr.rel (0) target = $region57
    $region56: #{tpu_custom_call.1} parent=1 // pred_region
      %121 = dma.done [#allocation9], 1024
    $region57: #{tpu_custom_call.1} parent=1 // pred_fallthru
      _
    // Predicated region
    $region58: #{tpu_custom_call.1} parent=1 // pred_check
      _
    $region59: #{tpu_custom_call.1} parent=1 // pred_check_branch
      %123 = sbr.rel (0) target = $region61
    $region60: #{tpu_custom_call.1} parent=1 // pred_region
      %125 = dma.done [#allocation9], 1024
    $region61: #{tpu_custom_call.1} parent=1 // pred_fallthru
      _
    // Predicated region
    $region62: #{tpu_custom_call.1} parent=1 // pred_check
      _
    $region63: #{tpu_custom_call.1} parent=1 // pred_check_branch
      %127 = sbr.rel (0) target = $region65
    $region64: #{tpu_custom_call.1} parent=1 // pred_region
      %129 = dma.done [#allocation12], 1024
    $region65: #{tpu_custom_call.1} parent=1 // pred_fallthru
      _
    %v130 = vld [vmem:[#allocation5] sm:$0xf]
    %v131 = vld [vmem:[#allocation5 + $0x4] sm:$0xf]
    %v132 = vld [vmem:[#allocation5 + $0x8] sm:$0xf]
    %v133 = vld [vmem:[#allocation5 + $0xc] sm:$0xf]
    %v134 = vld [vmem:[#allocation5 + $0x10] sm:$0xf]
    %v135 = vld [vmem:[#allocation5 + $0x14] sm:$0xf]
    %v136 = vld [vmem:[#allocation5 + $0x18] sm:$0xf]
    %v137 = vld [vmem:[#allocation5 + $0x1c] sm:$0xf]
    %v138 = vld [vmem:[#allocation5 + $0x20] sm:$0xf]
    %v139 = vld [vmem:[#allocation5 + $0x24] sm:$0xf]
    %v140 = vld [vmem:[#allocation5 + $0x28] sm:$0xf]
    %v141 = vld [vmem:[#allocation5 + $0x2c] sm:$0xf]
    %v142 = vld [vmem:[#allocation5 + $0x30] sm:$0xf]
    %v143 = vld [vmem:[#allocation5 + $0x34] sm:$0xf]
    %v144 = vld [vmem:[#allocation5 + $0x38] sm:$0xf]
    %v145 = vld [vmem:[#allocation5 + $0x3c] sm:$0xf]
    %v146 = vunpack.c.l.bf16 %v130
    %v147 = vunpack.c.l.bf16 %v131
    %v148 = vunpack.c.l.bf16 %v132
    %v149 = vunpack.c.l.bf16 %v133
    %v150 = vunpack.c.l.bf16 %v134
    %v151 = vunpack.c.l.bf16 %v135
    %v152 = vunpack.c.l.bf16 %v136
    %v153 = vunpack.c.l.bf16 %v137
    %v154 = vunpack.c.l.bf16 %v138
    %v155 = vunpack.c.l.bf16 %v139
    %v156 = vunpack.c.l.bf16 %v140
    %v157 = vunpack.c.l.bf16 %v141
    %v158 = vunpack.c.l.bf16 %v142
    %v159 = vunpack.c.l.bf16 %v143
    %v160 = vunpack.c.l.bf16 %v144
    %v161 = vunpack.c.l.bf16 %v145
    %v162 = vld [vmem:[#allocation7] sm:$0xf]
    %v163 = vld [vmem:[#allocation7 + $0x4] sm:$0xf]
    %v164 = vld [vmem:[#allocation7 + $0x8] sm:$0xf]
    %v165 = vld [vmem:[#allocation7 + $0xc] sm:$0xf]
    %v166 = vld [vmem:[#allocation7 + $0x10] sm:$0xf]
    %v167 = vld [vmem:[#allocation7 + $0x14] sm:$0xf]
    %v168 = vld [vmem:[#allocation7 + $0x18] sm:$0xf]
    %v169 = vld [vmem:[#allocation7 + $0x1c] sm:$0xf]
    %v170 = vld [vmem:[#allocation7 + $0x20] sm:$0xf]
    %v171 = vld [vmem:[#allocation7 + $0x24] sm:$0xf]
    %v172 = vld [vmem:[#allocation7 + $0x28] sm:$0xf]
    %v173 = vld [vmem:[#allocation7 + $0x2c] sm:$0xf]
    %v174 = vld [vmem:[#allocation7 + $0x30] sm:$0xf]
    %v175 = vld [vmem:[#allocation7 + $0x34] sm:$0xf]
    %v176 = vld [vmem:[#allocation7 + $0x38] sm:$0xf]
    %v177 = vld [vmem:[#allocation7 + $0x3c] sm:$0xf]
    %v178 = vunpack.c.l.bf16 %v162
    %v179 = vunpack.c.l.bf16 %v163
    %v180 = vunpack.c.l.bf16 %v164
    %v181 = vunpack.c.l.bf16 %v165
    %v182 = vunpack.c.l.bf16 %v166
    %v183 = vunpack.c.l.bf16 %v167
    %v184 = vunpack.c.l.bf16 %v168
    %v185 = vunpack.c.l.bf16 %v169
    %v186 = vunpack.c.l.bf16 %v170
    %v187 = vunpack.c.l.bf16 %v171
    %v188 = vunpack.c.l.bf16 %v172
    %v189 = vunpack.c.l.bf16 %v173
    %v190 = vunpack.c.l.bf16 %v174
    %v191 = vunpack.c.l.bf16 %v175
    %v192 = vunpack.c.l.bf16 %v176
    %v193 = vunpack.c.l.bf16 %v177
    %v194 = vld [vmem:[#allocation2] sm:$0xf]
    %v195 = vld [vmem:[#allocation2 + $0x4] sm:$0xf]
    %v196 = vld [vmem:[#allocation2 + $0x8] sm:$0xf]
    %v197 = vld [vmem:[#allocation2 + $0xc] sm:$0xf]
    %v198 = vld [vmem:[#allocation2 + $0x10] sm:$0xf]
    %v199 = vld [vmem:[#allocation2 + $0x14] sm:$0xf]
    %v200 = vld [vmem:[#allocation2 + $0x18] sm:$0xf]
    %v201 = vld [vmem:[#allocation2 + $0x1c] sm:$0xf]
    %v202 = vld [vmem:[#allocation2 + $0x20] sm:$0xf]
    %v203 = vld [vmem:[#allocation2 + $0x24] sm:$0xf]
    %v204 = vld [vmem:[#allocation2 + $0x28] sm:$0xf]
    %v205 = vld [vmem:[#allocation2 + $0x2c] sm:$0xf]
    %v206 = vld [vmem:[#allocation2 + $0x30] sm:$0xf]
    %v207 = vld [vmem:[#allocation2 + $0x34] sm:$0xf]
    %v208 = vld [vmem:[#allocation2 + $0x38] sm:$0xf]
    %v209 = vld [vmem:[#allocation2 + $0x3c] sm:$0xf]
    %v210 = vunpack.c.l.bf16 %v194
    %v211 = vunpack.c.l.bf16 %v195
    %v212 = vunpack.c.l.bf16 %v196
    %v213 = vunpack.c.l.bf16 %v197
    %v214 = vunpack.c.l.bf16 %v198
    %v215 = vunpack.c.l.bf16 %v199
    %v216 = vunpack.c.l.bf16 %v200
    %v217 = vunpack.c.l.bf16 %v201
    %v218 = vunpack.c.l.bf16 %v202
    %v219 = vunpack.c.l.bf16 %v203
    %v220 = vunpack.c.l.bf16 %v204
    %v221 = vunpack.c.l.bf16 %v205
    %v222 = vunpack.c.l.bf16 %v206
    %v223 = vunpack.c.l.bf16 %v207
    %v224 = vunpack.c.l.bf16 %v208
    %v225 = vunpack.c.l.bf16 %v209
    %226 = vmatpush.msra.mxu0 %v225
    %227 = vmatpush.msra.mxu0 %v224
    %228 = vmatpush.msra.mxu0 %v223
    %229 = vmatpush.msra.mxu0 %v222
    %230 = vmatpush.msra.mxu0 %v221
    %231 = vmatpush.msra.mxu0 %v220
    %232 = vmatpush.msra.mxu0 %v219
    %233 = vmatpush.msra.mxu0 %v218
    %234 = vmatpush.msra.mxu0 %v217
    %235 = vmatpush.msra.mxu0 %v216
    %236 = vmatpush.msra.mxu0 %v215
    %237 = vmatpush.msra.mxu0 %v214
    %238 = vmatpush.msra.mxu0 %v213
    %239 = vmatpush.msra.mxu0 %v212
    %240 = vmatpush.msra.mxu0 %v211
    %241 = vmatpush.msra.mxu0 %v210
    %242 = vmatmul.f32.gmra.mxu0 %v146
    %v243 = vpop.f32.mrf.mxu0
    %v244 = vadd.f32 0.0, %v243
    %245 = vmatmul.f32.gmra.mxu0 %v147
    %v246 = vpop.f32.mrf.mxu0
    %v247 = vadd.f32 0.0, %v246
    %248 = vmatmul.f32.gmra.mxu0 %v148
    %v249 = vpop.f32.mrf.mxu0
    %v250 = vadd.f32 0.0, %v249
    %251 = vmatmul.f32.gmra.mxu0 %v149
    %v252 = vpop.f32.mrf.mxu0
    %v253 = vadd.f32 0.0, %v252
    %254 = vmatmul.f32.gmra.mxu0 %v150
    %v255 = vpop.f32.mrf.mxu0
    %v256 = vadd.f32 0.0, %v255
    %257 = vmatmul.f32.gmra.mxu0 %v151
    %v258 = vpop.f32.mrf.mxu0
    %v259 = vadd.f32 0.0, %v258
    %260 = vmatmul.f32.gmra.mxu0 %v152
    %v261 = vpop.f32.mrf.mxu0
    %v262 = vadd.f32 0.0, %v261
    %263 = vmatmul.f32.gmra.mxu0 %v153
    %v264 = vpop.f32.mrf.mxu0
    %v265 = vadd.f32 0.0, %v264
    %266 = vmatmul.f32.gmra.mxu0 %v154
    %v267 = vpop.f32.mrf.mxu0
    %v268 = vadd.f32 0.0, %v267
    %269 = vmatmul.f32.gmra.mxu0 %v155
    %v270 = vpop.f32.mrf.mxu0
    %v271 = vadd.f32 0.0, %v270
    %272 = vmatmul.f32.gmra.mxu0 %v156
    %v273 = vpop.f32.mrf.mxu0
    %v274 = vadd.f32 0.0, %v273
    %275 = vmatmul.f32.gmra.mxu0 %v157
    %v276 = vpop.f32.mrf.mxu0
    %v277 = vadd.f32 0.0, %v276
    %278 = vmatmul.f32.gmra.mxu0 %v158
    %v279 = vpop.f32.mrf.mxu0
    %v280 = vadd.f32 0.0, %v279
    %281 = vmatmul.f32.gmra.mxu0 %v159
    %v282 = vpop.f32.mrf.mxu0
    %v283 = vadd.f32 0.0, %v282
    %284 = vmatmul.f32.gmra.mxu0 %v160
    %v285 = vpop.f32.mrf.mxu0
    %v286 = vadd.f32 0.0, %v285
    %287 = vmatmul.f32.gmra.mxu0 %v161
    %v288 = vpop.f32.mrf.mxu0
    %v289 = vadd.f32 0.0, %v288
    %290 = vdwg.mxu0
    %v291 = vld [vmem:[#allocation8] sm:$0xf]
    %v292 = vld [vmem:[#allocation8 + $0x4] sm:$0xf]
    %v293 = vld [vmem:[#allocation8 + $0x8] sm:$0xf]
    %v294 = vld [vmem:[#allocation8 + $0xc] sm:$0xf]
    %v295 = vld [vmem:[#allocation8 + $0x10] sm:$0xf]
    %v296 = vld [vmem:[#allocation8 + $0x14] sm:$0xf]
    %v297 = vld [vmem:[#allocation8 + $0x18] sm:$0xf]
    %v298 = vld [vmem:[#allocation8 + $0x1c] sm:$0xf]
    %v299 = vld [vmem:[#allocation8 + $0x20] sm:$0xf]
    %v300 = vld [vmem:[#allocation8 + $0x24] sm:$0xf]
    %v301 = vld [vmem:[#allocation8 + $0x28] sm:$0xf]
    %v302 = vld [vmem:[#allocation8 + $0x2c] sm:$0xf]
    %v303 = vld [vmem:[#allocation8 + $0x30] sm:$0xf]
    %v304 = vld [vmem:[#allocation8 + $0x34] sm:$0xf]
    %v305 = vld [vmem:[#allocation8 + $0x38] sm:$0xf]
    %v306 = vld [vmem:[#allocation8 + $0x3c] sm:$0xf]
    %v307 = vunpack.c.l.bf16 %v291
    %v308 = vunpack.c.l.bf16 %v292
    %v309 = vunpack.c.l.bf16 %v293
    %v310 = vunpack.c.l.bf16 %v294
    %v311 = vunpack.c.l.bf16 %v295
    %v312 = vunpack.c.l.bf16 %v296
    %v313 = vunpack.c.l.bf16 %v297
    %v314 = vunpack.c.l.bf16 %v298
    %v315 = vunpack.c.l.bf16 %v299
    %v316 = vunpack.c.l.bf16 %v300
    %v317 = vunpack.c.l.bf16 %v301
    %v318 = vunpack.c.l.bf16 %v302
    %v319 = vunpack.c.l.bf16 %v303
    %v320 = vunpack.c.l.bf16 %v304
    %v321 = vunpack.c.l.bf16 %v305
    %v322 = vunpack.c.l.bf16 %v306
    %v323 = vld [vmem:[%s4] sm:$0x1]
    %v325 = vperm.slane %v323, 0
    %327 = vmatpush.msra.mxu0 %v322
    %328 = vmatpush.msra.mxu0 %v321
    %329 = vmatpush.msra.mxu0 %v320
    %330 = vmatpush.msra.mxu0 %v319
    %331 = vmatpush.msra.mxu0 %v318
    %332 = vmatpush.msra.mxu0 %v317
    %333 = vmatpush.msra.mxu0 %v316
    %334 = vmatpush.msra.mxu0 %v315
    %335 = vmatpush.msra.mxu0 %v314
    %336 = vmatpush.msra.mxu0 %v313
    %337 = vmatpush.msra.mxu0 %v312
    %338 = vmatpush.msra.mxu0 %v311
    %339 = vmatpush.msra.mxu0 %v310
    %340 = vmatpush.msra.mxu0 %v309
    %341 = vmatpush.msra.mxu0 %v308
    %342 = vmatpush.msra.mxu0 %v307
    %343 = vmatmul.f32.gmra.mxu0 %v244
    %v344 = vpop.f32.mrf.mxu0
    %v345 = vadd.f32 %v325, %v344
    %346 = vmatmul.f32.gmra.mxu0 %v247
    %v347 = vpop.f32.mrf.mxu0
    %v348 = vadd.f32 %v325, %v347
    %349 = vmatmul.f32.gmra.mxu0 %v250
    %v350 = vpop.f32.mrf.mxu0
    %v351 = vadd.f32 %v325, %v350
    %352 = vmatmul.f32.gmra.mxu0 %v253
    %v353 = vpop.f32.mrf.mxu0
    %v354 = vadd.f32 %v325, %v353
    %355 = vmatmul.f32.gmra.mxu0 %v256
    %v356 = vpop.f32.mrf.mxu0
    %v357 = vadd.f32 %v325, %v356
    %358 = vmatmul.f32.gmra.mxu0 %v259
    %v359 = vpop.f32.mrf.mxu0
    %v360 = vadd.f32 %v325, %v359
    %361 = vmatmul.f32.gmra.mxu0 %v262
    %v362 = vpop.f32.mrf.mxu0
    %v363 = vadd.f32 %v325, %v362
    %364 = vmatmul.f32.gmra.mxu0 %v265
    %v365 = vpop.f32.mrf.mxu0
    %v366 = vadd.f32 %v325, %v365
    %367 = vmatmul.f32.gmra.mxu0 %v268
    %v368 = vpop.f32.mrf.mxu0
    %v369 = vadd.f32 %v325, %v368
    %370 = vmatmul.f32.gmra.mxu0 %v271
    %v371 = vpop.f32.mrf.mxu0
    %v372 = vadd.f32 %v325, %v371
    %373 = vmatmul.f32.gmra.mxu0 %v274
    %v374 = vpop.f32.mrf.mxu0
    %v375 = vadd.f32 %v325, %v374
    %376 = vmatmul.f32.gmra.mxu0 %v277
    %v377 = vpop.f32.mrf.mxu0
    %v378 = vadd.f32 %v325, %v377
    %379 = vmatmul.f32.gmra.mxu0 %v280
    %v380 = vpop.f32.mrf.mxu0
    %v381 = vadd.f32 %v325, %v380
    %382 = vmatmul.f32.gmra.mxu0 %v283
    %v383 = vpop.f32.mrf.mxu0
    %v384 = vadd.f32 %v325, %v383
    %385 = vmatmul.f32.gmra.mxu0 %v286
    %v386 = vpop.f32.mrf.mxu0
    %v387 = vadd.f32 %v325, %v386
    %388 = vmatmul.f32.gmra.mxu0 %v289
    %v389 = vpop.f32.mrf.mxu0
    %v390 = vadd.f32 %v325, %v389
    %391 = vdwg.mxu0
    %v392 = vmax.f32 %v345, 0.0
    %v393 = vmax.f32 %v348, 0.0
    %v394 = vmax.f32 %v351, 0.0
    %v395 = vmax.f32 %v354, 0.0
    %v396 = vmax.f32 %v357, 0.0
    %v397 = vmax.f32 %v360, 0.0
    %v398 = vmax.f32 %v363, 0.0
    %v399 = vmax.f32 %v366, 0.0
    %v400 = vmax.f32 %v369, 0.0
    %v401 = vmax.f32 %v372, 0.0
    %v402 = vmax.f32 %v375, 0.0
    %v403 = vmax.f32 %v378, 0.0
    %v404 = vmax.f32 %v381, 0.0
    %v405 = vmax.f32 %v384, 0.0
    %v406 = vmax.f32 %v387, 0.0
    %v407 = vmax.f32 %v390, 0.0
    %408 = vmatpush.msra.mxu0 %v407
    %409 = vmatpush.msra.mxu0 %v406
    %410 = vmatpush.msra.mxu0 %v405
    %411 = vmatpush.msra.mxu0 %v404
    %412 = vmatpush.msra.mxu0 %v403
    %413 = vmatpush.msra.mxu0 %v402
    %414 = vmatpush.msra.mxu0 %v401
    %415 = vmatpush.msra.mxu0 %v400
    %416 = vmatpush.msra.mxu0 %v399
    %417 = vmatpush.msra.mxu0 %v398
    %418 = vmatpush.msra.mxu0 %v397
    %419 = vmatpush.msra.mxu0 %v396
    %420 = vmatpush.msra.mxu0 %v395
    %421 = vmatpush.msra.mxu0 %v394
    %422 = vmatpush.msra.mxu0 %v393
    %423 = vmatpush.msra.mxu0 %v392
    %424 = vmatmul.f32.gmra.mxu0 %v178
    %v425 = vpop.f32.mrf.mxu0
    %v426 = vadd.f32 0.0, %v425
    %427 = vmatmul.f32.gmra.mxu0 %v179
    %v428 = vpop.f32.mrf.mxu0
    %v429 = vadd.f32 0.0, %v428
    %430 = vmatmul.f32.gmra.mxu0 %v180
    %v431 = vpop.f32.mrf.mxu0
    %v432 = vadd.f32 0.0, %v431
    %433 = vmatmul.f32.gmra.mxu0 %v181
    %v434 = vpop.f32.mrf.mxu0
    %v435 = vadd.f32 0.0, %v434
    %436 = vmatmul.f32.gmra.mxu0 %v182
    %v437 = vpop.f32.mrf.mxu0
    %v438 = vadd.f32 0.0, %v437
    %439 = vmatmul.f32.gmra.mxu0 %v183
    %v440 = vpop.f32.mrf.mxu0
    %v441 = vadd.f32 0.0, %v440
    %442 = vmatmul.f32.gmra.mxu0 %v184
    %v443 = vpop.f32.mrf.mxu0
    %v444 = vadd.f32 0.0, %v443
    %445 = vmatmul.f32.gmra.mxu0 %v185
    %v446 = vpop.f32.mrf.mxu0
    %v447 = vadd.f32 0.0, %v446
    %448 = vmatmul.f32.gmra.mxu0 %v186
    %v449 = vpop.f32.mrf.mxu0
    %v450 = vadd.f32 0.0, %v449
    %451 = vmatmul.f32.gmra.mxu0 %v187
    %v452 = vpop.f32.mrf.mxu0
    %v453 = vadd.f32 0.0, %v452
    %454 = vmatmul.f32.gmra.mxu0 %v188
    %v455 = vpop.f32.mrf.mxu0
    %v456 = vadd.f32 0.0, %v455
    %457 = vmatmul.f32.gmra.mxu0 %v189
    %v458 = vpop.f32.mrf.mxu0
    %v459 = vadd.f32 0.0, %v458
    %460 = vmatmul.f32.gmra.mxu0 %v190
    %v461 = vpop.f32.mrf.mxu0
    %v462 = vadd.f32 0.0, %v461
    %463 = vmatmul.f32.gmra.mxu0 %v191
    %v464 = vpop.f32.mrf.mxu0
    %v465 = vadd.f32 0.0, %v464
    %466 = vmatmul.f32.gmra.mxu0 %v192
    %v467 = vpop.f32.mrf.mxu0
    %v468 = vadd.f32 0.0, %v467
    %469 = vmatmul.f32.gmra.mxu0 %v193
    %v470 = vpop.f32.mrf.mxu0
    %v471 = vadd.f32 0.0, %v470
    %472 = vdwg.mxu0
    %v473 = vld [vmem:[#allocation10] sm:$0xf]
    %v474 = vld [vmem:[#allocation10 + $0x4] sm:$0xf]
    %v475 = vld [vmem:[#allocation10 + $0x8] sm:$0xf]
    %v476 = vld [vmem:[#allocation10 + $0xc] sm:$0xf]
    %v477 = vld [vmem:[#allocation10 + $0x10] sm:$0xf]
    %v478 = vld [vmem:[#allocation10 + $0x14] sm:$0xf]
    %v479 = vld [vmem:[#allocation10 + $0x18] sm:$0xf]
    %v480 = vld [vmem:[#allocation10 + $0x1c] sm:$0xf]
    %v481 = vld [vmem:[#allocation10 + $0x20] sm:$0xf]
    %v482 = vld [vmem:[#allocation10 + $0x24] sm:$0xf]
    %v483 = vld [vmem:[#allocation10 + $0x28] sm:$0xf]
    %v484 = vld [vmem:[#allocation10 + $0x2c] sm:$0xf]
    %v485 = vld [vmem:[#allocation10 + $0x30] sm:$0xf]
    %v486 = vld [vmem:[#allocation10 + $0x34] sm:$0xf]
    %v487 = vld [vmem:[#allocation10 + $0x38] sm:$0xf]
    %v488 = vld [vmem:[#allocation10 + $0x3c] sm:$0xf]
    %v489 = vunpack.c.l.bf16 %v473
    %v490 = vunpack.c.l.bf16 %v474
    %v491 = vunpack.c.l.bf16 %v475
    %v492 = vunpack.c.l.bf16 %v476
    %v493 = vunpack.c.l.bf16 %v477
    %v494 = vunpack.c.l.bf16 %v478
    %v495 = vunpack.c.l.bf16 %v479
    %v496 = vunpack.c.l.bf16 %v480
    %v497 = vunpack.c.l.bf16 %v481
    %v498 = vunpack.c.l.bf16 %v482
    %v499 = vunpack.c.l.bf16 %v483
    %v500 = vunpack.c.l.bf16 %v484
    %v501 = vunpack.c.l.bf16 %v485
    %v502 = vunpack.c.l.bf16 %v486
    %v503 = vunpack.c.l.bf16 %v487
    %v504 = vunpack.c.l.bf16 %v488
    %v505 = vld [vmem:[%s6] sm:$0x1]
    %v507 = vperm.slane %v505, 0
    %509 = vmatpush.msra.mxu0 %v504
    %510 = vmatpush.msra.mxu0 %v503
    %511 = vmatpush.msra.mxu0 %v502
    %512 = vmatpush.msra.mxu0 %v501
    %513 = vmatpush.msra.mxu0 %v500
    %514 = vmatpush.msra.mxu0 %v499
    %515 = vmatpush.msra.mxu0 %v498
    %516 = vmatpush.msra.mxu0 %v497
    %517 = vmatpush.msra.mxu0 %v496
    %518 = vmatpush.msra.mxu0 %v495
    %519 = vmatpush.msra.mxu0 %v494
    %520 = vmatpush.msra.mxu0 %v493
    %521 = vmatpush.msra.mxu0 %v492
    %522 = vmatpush.msra.mxu0 %v491
    %523 = vmatpush.msra.mxu0 %v490
    %524 = vmatpush.msra.mxu0 %v489
    %525 = vmatmul.f32.gmra.mxu0 %v426
    %v526 = vpop.f32.mrf.mxu0
    %v527 = vadd.f32 %v507, %v526
    %528 = vmatmul.f32.gmra.mxu0 %v429
    %v529 = vpop.f32.mrf.mxu0
    %v530 = vadd.f32 %v507, %v529
    %531 = vmatmul.f32.gmra.mxu0 %v432
    %v532 = vpop.f32.mrf.mxu0
    %v533 = vadd.f32 %v507, %v532
    %534 = vmatmul.f32.gmra.mxu0 %v435
    %v535 = vpop.f32.mrf.mxu0
    %v536 = vadd.f32 %v507, %v535
    %537 = vmatmul.f32.gmra.mxu0 %v438
    %v538 = vpop.f32.mrf.mxu0
    %v539 = vadd.f32 %v507, %v538
    %540 = vmatmul.f32.gmra.mxu0 %v441
    %v541 = vpop.f32.mrf.mxu0
    %v542 = vadd.f32 %v507, %v541
    %543 = vmatmul.f32.gmra.mxu0 %v444
    %v544 = vpop.f32.mrf.mxu0
    %v545 = vadd.f32 %v507, %v544
    %546 = vmatmul.f32.gmra.mxu0 %v447
    %v547 = vpop.f32.mrf.mxu0
    %v548 = vadd.f32 %v507, %v547
    %549 = vmatmul.f32.gmra.mxu0 %v450
    %v550 = vpop.f32.mrf.mxu0
    %v551 = vadd.f32 %v507, %v550
    %552 = vmatmul.f32.gmra.mxu0 %v453
    %v553 = vpop.f32.mrf.mxu0
    %v554 = vadd.f32 %v507, %v553
    %555 = vmatmul.f32.gmra.mxu0 %v456
    %v556 = vpop.f32.mrf.mxu0
    %v557 = vadd.f32 %v507, %v556
    %558 = vmatmul.f32.gmra.mxu0 %v459
    %v559 = vpop.f32.mrf.mxu0
    %v560 = vadd.f32 %v507, %v559
    %561 = vmatmul.f32.gmra.mxu0 %v462
    %v562 = vpop.f32.mrf.mxu0
    %v563 = vadd.f32 %v507, %v562
    %564 = vmatmul.f32.gmra.mxu0 %v465
    %v565 = vpop.f32.mrf.mxu0
    %v566 = vadd.f32 %v507, %v565
    %567 = vmatmul.f32.gmra.mxu0 %v468
    %v568 = vpop.f32.mrf.mxu0
    %v569 = vadd.f32 %v507, %v568
    %570 = vmatmul.f32.gmra.mxu0 %v471
    %v571 = vpop.f32.mrf.mxu0
    %v572 = vadd.f32 %v507, %v571
    %573 = vdwg.mxu0
    %v574 = vmax.f32 %v527, 0.0
    %v575 = vmax.f32 %v530, 0.0
    %v576 = vmax.f32 %v533, 0.0
    %v577 = vmax.f32 %v536, 0.0
    %v578 = vmax.f32 %v539, 0.0
    %v579 = vmax.f32 %v542, 0.0
    %v580 = vmax.f32 %v545, 0.0
    %v581 = vmax.f32 %v548, 0.0
    %v582 = vmax.f32 %v551, 0.0
    %v583 = vmax.f32 %v554, 0.0
    %v584 = vmax.f32 %v557, 0.0
    %v585 = vmax.f32 %v560, 0.0
    %v586 = vmax.f32 %v563, 0.0
    %v587 = vmax.f32 %v566, 0.0
    %v588 = vmax.f32 %v569, 0.0
    %v589 = vmax.f32 %v572, 0.0
    %590 = vmatpush.msra.mxu0 %v589
    %591 = vmatpush.msra.mxu0 %v588
    %592 = vmatpush.msra.mxu0 %v587
    %593 = vmatpush.msra.mxu0 %v586
    %594 = vmatpush.msra.mxu0 %v585
    %595 = vmatpush.msra.mxu0 %v584
    %596 = vmatpush.msra.mxu0 %v583
    %597 = vmatpush.msra.mxu0 %v582
    %598 = vmatpush.msra.mxu0 %v581
    %599 = vmatpush.msra.mxu0 %v580
    %600 = vmatpush.msra.mxu0 %v579
    %601 = vmatpush.msra.mxu0 %v578
    %602 = vmatpush.msra.mxu0 %v577
    %603 = vmatpush.msra.mxu0 %v576
    %604 = vmatpush.msra.mxu0 %v575
    %605 = vmatpush.msra.mxu0 %v574
    %606 = vmatmul.f32.gmra.mxu0 %v146
    %v607 = vpop.f32.mrf.mxu0
    %v608 = vadd.f32 0.0, %v607
    %609 = vmatmul.f32.gmra.mxu0 %v147
    %v610 = vpop.f32.mrf.mxu0
    %v611 = vadd.f32 0.0, %v610
    %612 = vmatmul.f32.gmra.mxu0 %v148
    %v613 = vpop.f32.mrf.mxu0
    %v614 = vadd.f32 0.0, %v613
    %615 = vmatmul.f32.gmra.mxu0 %v149
    %v616 = vpop.f32.mrf.mxu0
    %v617 = vadd.f32 0.0, %v616
    %618 = vmatmul.f32.gmra.mxu0 %v150
    %v619 = vpop.f32.mrf.mxu0
    %v620 = vadd.f32 0.0, %v619
    %621 = vmatmul.f32.gmra.mxu0 %v151
    %v622 = vpop.f32.mrf.mxu0
    %v623 = vadd.f32 0.0, %v622
    %624 = vmatmul.f32.gmra.mxu0 %v152
    %v625 = vpop.f32.mrf.mxu0
    %v626 = vadd.f32 0.0, %v625
    %627 = vmatmul.f32.gmra.mxu0 %v153
    %v628 = vpop.f32.mrf.mxu0
    %v629 = vadd.f32 0.0, %v628
    %630 = vmatmul.f32.gmra.mxu0 %v154
    %v631 = vpop.f32.mrf.mxu0
    %v632 = vadd.f32 0.0, %v631
    %633 = vmatmul.f32.gmra.mxu0 %v155
    %v634 = vpop.f32.mrf.mxu0
    %v635 = vadd.f32 0.0, %v634
    %636 = vmatmul.f32.gmra.mxu0 %v156
    %v637 = vpop.f32.mrf.mxu0
    %v638 = vadd.f32 0.0, %v637
    %639 = vmatmul.f32.gmra.mxu0 %v157
    %v640 = vpop.f32.mrf.mxu0
    %v641 = vadd.f32 0.0, %v640
    %642 = vmatmul.f32.gmra.mxu0 %v158
    %v643 = vpop.f32.mrf.mxu0
    %v644 = vadd.f32 0.0, %v643
    %645 = vmatmul.f32.gmra.mxu0 %v159
    %v646 = vpop.f32.mrf.mxu0
    %v647 = vadd.f32 0.0, %v646
    %648 = vmatmul.f32.gmra.mxu0 %v160
    %v649 = vpop.f32.mrf.mxu0
    %v650 = vadd.f32 0.0, %v649
    %651 = vmatmul.f32.gmra.mxu0 %v161
    %v652 = vpop.f32.mrf.mxu0
    %v653 = vadd.f32 0.0, %v652
    %654 = vdwg.mxu0
    %v655 = vld [vmem:[#allocation11] sm:$0xf]
    %v656 = vld [vmem:[#allocation11 + $0x4] sm:$0xf]
    %v657 = vld [vmem:[#allocation11 + $0x8] sm:$0xf]
    %v658 = vld [vmem:[#allocation11 + $0xc] sm:$0xf]
    %v659 = vld [vmem:[#allocation11 + $0x10] sm:$0xf]
    %v660 = vld [vmem:[#allocation11 + $0x14] sm:$0xf]
    %v661 = vld [vmem:[#allocation11 + $0x18] sm:$0xf]
    %v662 = vld [vmem:[#allocation11 + $0x1c] sm:$0xf]
    %v663 = vld [vmem:[#allocation11 + $0x20] sm:$0xf]
    %v664 = vld [vmem:[#allocation11 + $0x24] sm:$0xf]
    %v665 = vld [vmem:[#allocation11 + $0x28] sm:$0xf]
    %v666 = vld [vmem:[#allocation11 + $0x2c] sm:$0xf]
    %v667 = vld [vmem:[#allocation11 + $0x30] sm:$0xf]
    %v668 = vld [vmem:[#allocation11 + $0x34] sm:$0xf]
    %v669 = vld [vmem:[#allocation11 + $0x38] sm:$0xf]
    %v670 = vld [vmem:[#allocation11 + $0x3c] sm:$0xf]
    %v671 = vunpack.c.l.bf16 %v655
    %v672 = vunpack.c.l.bf16 %v656
    %v673 = vunpack.c.l.bf16 %v657
    %v674 = vunpack.c.l.bf16 %v658
    %v675 = vunpack.c.l.bf16 %v659
    %v676 = vunpack.c.l.bf16 %v660
    %v677 = vunpack.c.l.bf16 %v661
    %v678 = vunpack.c.l.bf16 %v662
    %v679 = vunpack.c.l.bf16 %v663
    %v680 = vunpack.c.l.bf16 %v664
    %v681 = vunpack.c.l.bf16 %v665
    %v682 = vunpack.c.l.bf16 %v666
    %v683 = vunpack.c.l.bf16 %v667
    %v684 = vunpack.c.l.bf16 %v668
    %v685 = vunpack.c.l.bf16 %v669
    %v686 = vunpack.c.l.bf16 %v670
    %v687 = vld [vmem:[%s8] sm:$0x1]
    %v689 = vperm.slane %v687, 0
    %691 = vmatpush.msra.mxu0 %v686
    %692 = vmatpush.msra.mxu0 %v685
    %693 = vmatpush.msra.mxu0 %v684
    %694 = vmatpush.msra.mxu0 %v683
    %695 = vmatpush.msra.mxu0 %v682
    %696 = vmatpush.msra.mxu0 %v681
    %697 = vmatpush.msra.mxu0 %v680
    %698 = vmatpush.msra.mxu0 %v679
    %699 = vmatpush.msra.mxu0 %v678
    %700 = vmatpush.msra.mxu0 %v677
    %701 = vmatpush.msra.mxu0 %v676
    %702 = vmatpush.msra.mxu0 %v675
    %703 = vmatpush.msra.mxu0 %v674
    %704 = vmatpush.msra.mxu0 %v673
    %705 = vmatpush.msra.mxu0 %v672
    %706 = vmatpush.msra.mxu0 %v671
    %707 = vmatmul.f32.gmra.mxu0 %v608
    %v708 = vpop.f32.mrf.mxu0
    %v709 = vadd.f32 %v689, %v708
    %710 = vmatmul.f32.gmra.mxu0 %v611
    %v711 = vpop.f32.mrf.mxu0
    %v712 = vadd.f32 %v689, %v711
    %713 = vmatmul.f32.gmra.mxu0 %v614
    %v714 = vpop.f32.mrf.mxu0
    %v715 = vadd.f32 %v689, %v714
    %716 = vmatmul.f32.gmra.mxu0 %v617
    %v717 = vpop.f32.mrf.mxu0
    %v718 = vadd.f32 %v689, %v717
    %719 = vmatmul.f32.gmra.mxu0 %v620
    %v720 = vpop.f32.mrf.mxu0
    %v721 = vadd.f32 %v689, %v720
    %722 = vmatmul.f32.gmra.mxu0 %v623
    %v723 = vpop.f32.mrf.mxu0
    %v724 = vadd.f32 %v689, %v723
    %725 = vmatmul.f32.gmra.mxu0 %v626
    %v726 = vpop.f32.mrf.mxu0
    %v727 = vadd.f32 %v689, %v726
    %728 = vmatmul.f32.gmra.mxu0 %v629
    %v729 = vpop.f32.mrf.mxu0
    %v730 = vadd.f32 %v689, %v729
    %731 = vmatmul.f32.gmra.mxu0 %v632
    %v732 = vpop.f32.mrf.mxu0
    %v733 = vadd.f32 %v689, %v732
    %734 = vmatmul.f32.gmra.mxu0 %v635
    %v735 = vpop.f32.mrf.mxu0
    %v736 = vadd.f32 %v689, %v735
    %737 = vmatmul.f32.gmra.mxu0 %v638
    %v738 = vpop.f32.mrf.mxu0
    %v739 = vadd.f32 %v689, %v738
    %740 = vmatmul.f32.gmra.mxu0 %v641
    %v741 = vpop.f32.mrf.mxu0
    %v742 = vadd.f32 %v689, %v741
    %743 = vmatmul.f32.gmra.mxu0 %v644
    %v744 = vpop.f32.mrf.mxu0
    %v745 = vadd.f32 %v689, %v744
    %746 = vmatmul.f32.gmra.mxu0 %v647
    %v747 = vpop.f32.mrf.mxu0
    %v748 = vadd.f32 %v689, %v747
    %749 = vmatmul.f32.gmra.mxu0 %v650
    %v750 = vpop.f32.mrf.mxu0
    %v751 = vadd.f32 %v689, %v750
    %752 = vmatmul.f32.gmra.mxu0 %v653
    %v753 = vpop.f32.mrf.mxu0
    %v754 = vadd.f32 %v689, %v753
    %755 = vdwg.mxu0
    %v756 = vmax.f32 %v709, 0.0
    %v757 = vmax.f32 %v712, 0.0
    %v758 = vmax.f32 %v715, 0.0
    %v759 = vmax.f32 %v718, 0.0
    %v760 = vmax.f32 %v721, 0.0
    %v761 = vmax.f32 %v724, 0.0
    %v762 = vmax.f32 %v727, 0.0
    %v763 = vmax.f32 %v730, 0.0
    %v764 = vmax.f32 %v733, 0.0
    %v765 = vmax.f32 %v736, 0.0
    %v766 = vmax.f32 %v739, 0.0
    %v767 = vmax.f32 %v742, 0.0
    %v768 = vmax.f32 %v745, 0.0
    %v769 = vmax.f32 %v748, 0.0
    %v770 = vmax.f32 %v751, 0.0
    %v771 = vmax.f32 %v754, 0.0
    %v772 = vld [vmem:[%s9] sm:$0xf]
    %v773 = vunpack.c.l.bf16 %v772
    %774 = vmatpush.msra.mxu0 %v771
    %775 = vmatpush.msra.mxu0 %v770
    %776 = vmatpush.msra.mxu0 %v769
    %777 = vmatpush.msra.mxu0 %v768
    %778 = vmatpush.msra.mxu0 %v767
    %779 = vmatpush.msra.mxu0 %v766
    %780 = vmatpush.msra.mxu0 %v765
    %781 = vmatpush.msra.mxu0 %v764
    %782 = vmatpush.msra.mxu0 %v763
    %783 = vmatpush.msra.mxu0 %v762
    %784 = vmatpush.msra.mxu0 %v761
    %785 = vmatpush.msra.mxu0 %v760
    %786 = vmatpush.msra.mxu0 %v759
    %787 = vmatpush.msra.mxu0 %v758
    %788 = vmatpush.msra.mxu0 %v757
    %789 = vmatpush.msra.mxu0 %v756
    %790 = vmatmul.f32.gmra.mxu0 %v773
    %v791 = vpop.f32.mrf.mxu0
    %v792 = vadd.f32 0.0, %v791
    %793 = vdwg.mxu0
    %v794 = vlaneseq
    %v795 = vand.u32 %v794, 127
    %vm796 = vcmp.lt.s32.totalorder %v795, 8
    %v797 = vsel %vm796, %v792, -1e+30
    %798 = vmax.xlane.f32.xlu0 %v797
    %v799 = vpop.xlane.xlu0 %798
    %v800 = vsub.f32 %v797, %v799
    %v801 = vmul.f32 %v800, 1.442695
    %v802 = vpow.pop %v801
    %803 = vadd.xlane.f32.xlu0 %v802
    %v804 = vpop.xlane.xlu0 %803
    %v805 = vlog2.pop %v804
    %v806 = vmul.f32 %v805, 0.6931472
    %v807 = vsub.f32 %v800, %v806
    %808 = vst [vmem:[#allocation13] sm:$0xff] %v807
    // Predicated region
    $region66: #{tpu_custom_call.1} parent=1 // pred_check
      _
    $region67: #{tpu_custom_call.1} parent=1 // pred_check_branch
      %810 = sbr.rel (0) target = $region69
    $region68: #{tpu_custom_call.1} parent=1 // pred_region
      %812 = vsyncadd [#allocation4], 0
      %s814 = sshll.u32 [#allocation13], 4
      %s815 = int_to_ptr.vmem [resolvable:$true] %s814
      %s816 = sshll.u32 %s10, 4
      %s817 = int_to_ptr.hbm [resolvable:$true] %s816
      %819 = dma.vmem_to_hbm [thread:$0]  %s815, 128, %s817, [#allocation4]
    $region69: #{tpu_custom_call.1} parent=1 // pred_fallthru
      _
    // Predicated region
    $region70: #{tpu_custom_call.1} parent=1 // pred_check
      _
    $region71: #{tpu_custom_call.1} parent=1 // pred_check_branch
      %821 = sbr.rel (0) target = $region73
    $region72: #{tpu_custom_call.1} parent=1 // pred_region
      %823 = dma.done [#allocation4], 128
    $region73: #{tpu_custom_call.1} parent=1 // pred_fallthru
      _
    %824 = vsyncpa [#allocation3], 1
    %825 = vsyncpa [#allocation6], 1
    %826 = vsyncpa [#allocation9], 1
    %827 = vsyncpa [#allocation12], 1
    %828 = vsyncpa [#allocation4], 1

</llo_original>
